<compile_context>
chip_gen: v7x
topology: tpu7x:2x2x1
jax: 0.10.0
libtpu: 0.0.40
codegen_flags: <defaults>
</compile_context>

<pallas_src>
import functools
from math import sqrt

import jax
import jax.numpy as jnp
import numpy as np
from jax import lax
from jax.experimental import pallas as pl
from jax.experimental.pallas import tpu as pltpu


# ----------------------------- Pallas kernel -----------------------------

def nl_block_kernel(r_ref, w_ref, b_ref, out_ref, *, dim):
    R = r_ref[...]                                                   # (T, d)

    # Fused Q|K|V projection: one matmul against the packed (d, 3d) slab.
    qkv = (jnp.dot(R, w_ref[...], preferred_element_type=jnp.float32)
           + b_ref[...])                                             # (T, 3d)
    q = qkv[:, :dim]                                                 # W_rq(R)
    k = qkv[:, dim:2 * dim]                                          # W_rk(R)
    v = qkv[:, 2 * dim:]                                             # W_rv(R)

    # TT[i, j] = <k_i, q_j> / sqrt(d)   — contract last dims, no explicit .T
    tt = lax.dot_general(
        k, q,
        dimension_numbers=(((1,), (1,)), ((), ())),
        preferred_element_type=jnp.float32) * (1.0 / sqrt(dim))      # (T, T)

    # Row softmax over the lane axis (max-stabilised), EUP reciprocal.
    m = jnp.max(tt, axis=-1, keepdims=True)
    p = jnp.exp(tt - m)
    denom = jnp.sum(p, axis=-1, keepdims=True)
    a = p * pl.reciprocal(denom, approx=True)                        # (T, T)

    # Residual + attention-weighted values.
    out_ref[...] = R + jnp.dot(a, v, preferred_element_type=jnp.float32)


# ----------------------------- wrapper -----------------------------

@jax.jit
def nl_block_forward(R, w_qkv, b_qkv):
    """R: (B, T, d) batch of independent instances; w_qkv: (d, 3d); b_qkv: (1, 3d)."""
    B, T, d = R.shape
    kernel = functools.partial(nl_block_kernel, dim=d)
    return pl.pallas_call(
        kernel,
        out_shape=jax.ShapeDtypeStruct((B, T, d), jnp.float32),
        grid=(B,),
        in_specs=[
            # one instance per grid step (batch dim squeezed out of the ref)
            pl.BlockSpec((None, T, d), lambda b: (b, 0, 0)),
            # packed weights/biases: constant index_map -> stay resident in VMEM
            pl.BlockSpec((d, 3 * d), lambda b: (0, 0)),
            pl.BlockSpec((1, 3 * d), lambda b: (0, 0)),
        ],
        out_specs=pl.BlockSpec((None, T, d), lambda b: (b, 0, 0)),
        compiler_params=pltpu.CompilerParams(
            dimension_semantics=("parallel",)),   # megacore-shard the batch (v7x)
    )(R, w_qkv, b_qkv)


# ----------------------------- parameter init -----------------------------

def init_params(key, dim):
    """PyTorch nn.Linear default init for W_rq / W_rk / W_rv, packed [Q | K | V]."""
    bound = 1.0 / sqrt(dim)
    keys = jax.random.split(key, 6)
    ws, bs = [], []
    for i in range(3):
        w = jax.random.uniform(keys[2 * i], (dim, dim), jnp.float32, -bound, bound)
        b = jax.random.uniform(keys[2 * i + 1], (dim,), jnp.float32, -bound, bound)
        ws.append(w.T)          # store transposed so y = x @ W + b
        bs.append(b)
    w_qkv = jnp.concatenate(ws, axis=1)                # (d, 3d)
    b_qkv = jnp.concatenate(bs, axis=0).reshape(1, -1)  # (1, 3d)
    return w_qkv, b_qkv


# ----------------------------- pure-JAX reference -----------------------------

def nl_block_reference(R, w_qkv, b_qkv):
    d = R.shape[-1]
    qkv = R @ w_qkv + b_qkv
    q, k, v = qkv[..., :d], qkv[..., d:2 * d], qkv[..., 2 * d:]
    tt = jnp.einsum("btd,bsd->bts", k, q) / sqrt(d)
    a = jax.nn.softmax(tt, axis=-1)
    return R + jnp.einsum("bts,bsd->btd", a, v)


# ----------------------------- main -----------------------------

if __name__ == "__main__":
    dim = 32   # hidden size d
    T = 16     # sequence length
    B = 2      # independent instances batched along the parallel grid axis

    key = jax.random.PRNGKey(0)
    k_r, k_p = jax.random.split(key)
    R = jax.random.normal(k_r, (B, T, dim), jnp.float32)
    w_qkv, b_qkv = init_params(k_p, dim)

    out = nl_block_forward(R, w_qkv, b_qkv)
    jax.block_until_ready(out)

    ref = nl_block_reference(R, w_qkv, b_qkv)
    # tolerance loosened slightly for the EUP approximate reciprocal in softmax
    np.testing.assert_allclose(np.asarray(out), np.asarray(ref), rtol=1e-2, atol=1e-2)
    assert out.shape == (B, T, dim)

    print("KERNEL_OK")
</pallas_src>

<mosaic_0001>
module attributes {stable_mosaic.version = 11 : i64} {
  func.func @nl_block_kernel(%arg0: i32, %arg1: memref<1x16x32xf32, #tpu.memory_space<vmem>>, %arg2: memref<32x96xf32, #tpu.memory_space<vmem>>, %arg3: memref<1x96xf32, #tpu.memory_space<vmem>>, %arg4: memref<1x16x32xf32, #tpu.memory_space<vmem>>) attributes {dimension_semantics = [#tpu.dimension_semantics<parallel>], iteration_bounds = array<i64: 2>, scalar_prefetch = 0 : i64, scratch_operands = 0 : i64, tpu.core_type = #tpu.core_type<tc>, window_params = [{transform_indices = @transform_0, window_bounds = array<i64: 1, 16, 32>}, {pipeline_mode = #tpu.pipeline_mode<synchronous>, transform_indices = @transform_1, window_bounds = array<i64: 32, 96>}, {pipeline_mode = #tpu.pipeline_mode<synchronous>, transform_indices = @transform_2, window_bounds = array<i64: 1, 96>}, {transform_indices = @transform_3, window_bounds = array<i64: 1, 16, 32>}]} {
    %c0 = arith.constant 0 : index
    %c0_0 = arith.constant 0 : index
    %c0_1 = arith.constant 0 : index
    %0 = vector.load %arg1[%c0, %c0_0, %c0_1] : memref<1x16x32xf32, #tpu.memory_space<vmem>>, vector<1x16x32xf32>
    %1 = vector.shape_cast %0 : vector<1x16x32xf32> to vector<16x32xf32>
    %c0_2 = arith.constant 0 : index
    %c0_3 = arith.constant 0 : index
    %2 = vector.load %arg2[%c0_2, %c0_3] : memref<32x96xf32, #tpu.memory_space<vmem>>, vector<32x96xf32>
    %cst = arith.constant dense<0.000000e+00> : vector<16x96xf32>
    %3 = tpu.matmul %1, %2, %cst {dimension_numbers = #tpu.dot_dimension_numbers<[1], [0], [0], [1], [0, 0, 1, 1], [], []>} : vector<16x32xf32>, vector<32x96xf32>, vector<16x96xf32> -> vector<16x96xf32>
    %c0_4 = arith.constant 0 : index
    %c0_5 = arith.constant 0 : index
    %4 = vector.load %arg3[%c0_4, %c0_5] : memref<1x96xf32, #tpu.memory_space<vmem>>, vector<1x96xf32>
    %5 = vector.broadcast %4 : vector<1x96xf32> to vector<16x96xf32>
    %6 = arith.addf %3, %5 : vector<16x96xf32>
    %7 = vector.extract_strided_slice %6 {offsets = [0, 0], sizes = [16, 32], strides = [1, 1]} : vector<16x96xf32> to vector<16x32xf32>
    %8 = vector.extract_strided_slice %6 {offsets = [0, 32], sizes = [16, 32], strides = [1, 1]} : vector<16x96xf32> to vector<16x32xf32>
    %9 = vector.extract_strided_slice %6 {offsets = [0, 64], sizes = [16, 32], strides = [1, 1]} : vector<16x96xf32> to vector<16x32xf32>
    %cst_6 = arith.constant dense<0.000000e+00> : vector<16x16xf32>
    %10 = tpu.matmul %8, %7, %cst_6 {dimension_numbers = #tpu.dot_dimension_numbers<[1], [1], [0], [0], [0, 0, 1, 0], [], []>} : vector<16x32xf32>, vector<16x32xf32>, vector<16x16xf32> -> vector<16x16xf32>
    %cst_7 = arith.constant 0.176776692 : f32
    %11 = vector.broadcast %cst_7 : f32 to vector<16x16xf32>
    %12 = arith.mulf %10, %11 : vector<16x16xf32>
    %cst_8 = arith.constant dense<0xFF800000> : vector<16xf32>
    %13 = vector.multi_reduction <maximumf>, %12, %cst_8 [1] : vector<16x16xf32> to vector<16xf32>
    %14 = vector.shape_cast %13 : vector<16xf32> to vector<16x1xf32>
    %15 = vector.broadcast %14 : vector<16x1xf32> to vector<16x16xf32>
    %16 = arith.subf %12, %15 : vector<16x16xf32>
    %17 = math.exp %16 : vector<16x16xf32>
    %cst_9 = arith.constant dense<0.000000e+00> : vector<16xf32>
    %18 = vector.multi_reduction <add>, %17, %cst_9 [1] : vector<16x16xf32> to vector<16xf32>
    %19 = vector.shape_cast %18 : vector<16xf32> to vector<16x1xf32>
    %20 = tpu.reciprocal %19 {approx = true} : vector<16x1xf32> -> vector<16x1xf32>
    %21 = vector.broadcast %20 : vector<16x1xf32> to vector<16x16xf32>
    %22 = arith.mulf %17, %21 : vector<16x16xf32>
    %cst_10 = arith.constant dense<0.000000e+00> : vector<16x32xf32>
    %23 = tpu.matmul %22, %9, %cst_10 {dimension_numbers = #tpu.dot_dimension_numbers<[1], [0], [0], [1], [0, 0, 1, 1], [], []>} : vector<16x16xf32>, vector<16x32xf32>, vector<16x32xf32> -> vector<16x32xf32>
    %24 = arith.addf %1, %23 : vector<16x32xf32>
    %c0_11 = arith.constant 0 : index
    %c0_12 = arith.constant 0 : index
    %c0_13 = arith.constant 0 : index
    %25 = vector.load %arg4[%c0_11, %c0_12, %c0_13] : memref<1x16x32xf32, #tpu.memory_space<vmem>>, vector<1x16x32xf32>
    %26 = vector.shape_cast %25 : vector<1x16x32xf32> to vector<16x32xf32>
    %27 = vector.shape_cast %24 : vector<16x32xf32> to vector<1x16x32xf32>
    tpu.vector_store %arg4[%c0_11, %c0_12, %c0_13], %27 {strides = array<i32>} : memref<1x16x32xf32, #tpu.memory_space<vmem>>, vector<1x16x32xf32>,
    return
  }
  func.func @transform_0(%arg0: i32) -> (i32, i32, i32) {
    %c0_i32 = arith.constant 0 : i32
    %c0_i32_0 = arith.constant 0 : i32
    %c0_i32_1 = arith.constant 0 : i32
    return %arg0, %c0_i32, %c0_i32_0 : i32, i32, i32
  }
  func.func @transform_1(%arg0: i32) -> (i32, i32) {
    %c0_i32 = arith.constant 0 : i32
    %c0_i32_0 = arith.constant 0 : i32
    %c0_i32_1 = arith.constant 0 : i32
    return %c0_i32, %c0_i32_0 : i32, i32
  }
  func.func @transform_2(%arg0: i32) -> (i32, i32) {
    %c0_i32 = arith.constant 0 : i32
    %c0_i32_0 = arith.constant 0 : i32
    %c0_i32_1 = arith.constant 0 : i32
    return %c0_i32, %c0_i32_0 : i32, i32
  }
  func.func @transform_3(%arg0: i32) -> (i32, i32, i32) {
    %c0_i32 = arith.constant 0 : i32
    %c0_i32_0 = arith.constant 0 : i32
    %c0_i32_1 = arith.constant 0 : i32
    return %arg0, %c0_i32, %c0_i32_0 : i32, i32, i32
  }
}

</mosaic_0001>

<llo_original>
// kernel: nl_block_forward.1
$region0: #{nl_block_forward.1}
  #allocation0 [shape = 'u32[]', space=smem, size = 0x4, offset = 0x4, fixed_abs, tag = 'smem constant byte address 0x4 - core index']
  #allocation1 [shape = 'u32[144,128]{1,0:T(1,128)}', space=vmem, size = 0x12000, scoped, tag = 'internal scratch']
  %s0 = inlined_call_operand.hbm [shape: f32[2,16,32], index: 0, kind: input, shape index: {}]
  %s1 = inlined_call_operand.hbm [shape: f32[32,96], index: 1, kind: input, shape index: {}]
  %s2 = inlined_call_operand.vmem [shape: f32[1,96], index: 2, kind: input, shape index: {}]
  %s3 = inlined_call_operand.hbm [shape: f32[2,16,32], index: 3, kind: output, shape index: {}]
  %s4 = sld [smem:[#allocation0]]
  $region53: #{nl_block_forward.1} parent=0
    _
  %s6 = ssub.s32 1, %s4
  %s7 = scalar_select 0, %s6, %s4
  $region1: #{nl_block_forward.1} parent=0
    #allocation2 [shape = 'u8[16384]{0}', space=vmem, size = 0x4000, scoped, tag = 'input window, operand 0']
    #allocation3 [shape = 's32[2]{0}', space=sflag, size = 0x8, scoped, tag = 'scoped memory for nl_block_forward.1']
    #allocation4 [shape = 's32[2]{0}', space=sflag, size = 0x8, scoped, tag = 'scoped memory for nl_block_forward.1']
    #allocation5 [shape = 'u8[16384]{0}', space=vmem, size = 0x4000, scoped, tag = 'input window, operand 1, single buffered']
    #allocation6 [shape = 's32[1]{0}', space=sflag, size = 0x4, scoped, tag = 'scoped memory for nl_block_forward.1']
    #allocation7 [shape = 'u8[16384]{0}', space=vmem, size = 0x4000, scoped, tag = 'output window, operand 0']
    %8 = vsyncpa [#allocation3], 0
    %s9 = scalar_lea.sflag [#allocation3], 1
    %10 = vsyncpa %s9, 0
    %11 = vsyncpa [#allocation6], 0
    %12 = vsyncpa [#allocation4], 0
    %s13 = scalar_lea.sflag [#allocation4], 1
    %14 = vsyncpa %s13, 0
    loop: start=0, step=1, limit=4
    $region2: #{nl_block_forward.1} parent=1 // loop_pre_header
      _
    $region3: #{nl_block_forward.1} parent=1 // loop_header
      %s16 = sphi 0, %s20
      %p17 = scmp.ge.s32.totalorder %s16, 4
      %s26 = sphi 0, %s28
      %s29 = sphi 0, %s26
      %s30 = sphi 0, %s29
      %s46 = sphi 0, %s30
      %s50 = sphi 0, %s50
      %s52 = sphi 0, %s50
      %s53 = sphi 0, %s52
      %s67 = sphi 0, %s53
      %s71 = sphi 0, %s71
      %s73 = sphi 0, %s71
      %s74 = sphi 0, %s73
      %s88 = sphi 0, %s74
      %s94 = sphi 0, %s96
      %s97 = sphi 0, %s94
      %s98 = sphi 0, %s97
      %s114 = sphi 0, %s98
    $region4: #{nl_block_forward.1} parent=1 // loop_header_branch
      %19 = sbr.rel (%p17) target = $region8
    $region5: #{nl_block_forward.1} parent=1 // loop_body
      %s21 = ssub.s32 %s16, 1
      %s22 = ssub.s32 %s16, 2
      %s23 = sadd.s32 %s16, 1
      %s24 = ssub.s32 %s16, %s23
      %p25 = scmp.eq.s32.totalorder %s24, 0
      %s27 = sadd.s32 %s26, 1
      %s28 = scalar_select %p25, %s26, %s27
      %p31 = pneg %p25
      %p32 = scmp.eq.s32.totalorder %s16, 1
      %p33 = por %p31, %p32
      %p34 = scmp.ne.s32.totalorder %s26, %s29
      %p35 = scmp.eq.s32.totalorder %s16, 0
      %p36 = por %p34, %p35
      %p37 = scmp.ne.s32.totalorder %s26, %s29
      %p38 = scmp.eq.s32.totalorder %s21, 1
      %p39 = por %p37, %p38
      %p40 = scmp.ne.s32.totalorder %s29, %s30
      %p41 = scmp.eq.s32.totalorder %s21, 0
      %p42 = por %p40, %p41
      %p43 = scmp.ne.s32.totalorder %s29, %s30
      %p44 = scmp.eq.s32.totalorder %s22, 1
      %p45 = por %p43, %p44
      %p47 = scmp.ne.s32.totalorder %s30, %s46
      %p48 = scmp.eq.s32.totalorder %s22, 0
      %p49 = por %p47, %p48
      %s51 = sadd.s32 %s50, 1
      %p54 = scmp.eq.s32.totalorder %s16, 1
      %p55 = scmp.ne.s32.totalorder %s50, %s52
      %p56 = scmp.eq.s32.totalorder %s16, 0
      %p57 = por %p55, %p56
      %p58 = scmp.ne.s32.totalorder %s50, %s52
      %p59 = scmp.eq.s32.totalorder %s21, 1
      %p60 = por %p58, %p59
      %p61 = scmp.ne.s32.totalorder %s52, %s53
      %p62 = scmp.eq.s32.totalorder %s21, 0
      %p63 = por %p61, %p62
      %p64 = scmp.ne.s32.totalorder %s52, %s53
      %p65 = scmp.eq.s32.totalorder %s22, 1
      %p66 = por %p64, %p65
      %p68 = scmp.ne.s32.totalorder %s53, %s67
      %p69 = scmp.eq.s32.totalorder %s22, 0
      %p70 = por %p68, %p69
      %s72 = sadd.s32 %s71, 1
      %p75 = scmp.eq.s32.totalorder %s16, 1
      %p76 = scmp.ne.s32.totalorder %s71, %s73
      %p77 = scmp.eq.s32.totalorder %s16, 0
      %p78 = por %p76, %p77
      %p79 = scmp.ne.s32.totalorder %s71, %s73
      %p80 = scmp.eq.s32.totalorder %s21, 1
      %p81 = por %p79, %p80
      %p82 = scmp.ne.s32.totalorder %s73, %s74
      %p83 = scmp.eq.s32.totalorder %s21, 0
      %p84 = por %p82, %p83
      %p85 = scmp.ne.s32.totalorder %s73, %s74
      %p86 = scmp.eq.s32.totalorder %s22, 1
      %p87 = por %p85, %p86
      %p89 = scmp.ne.s32.totalorder %s74, %s88
      %p90 = scmp.eq.s32.totalorder %s22, 0
      %p91 = por %p89, %p90
      %s92 = ssub.s32 %s16, %s23
      %p93 = scmp.eq.s32.totalorder %s92, 0
      %s95 = sadd.s32 %s94, 1
      %s96 = scalar_select %p93, %s94, %s95
      %p99 = pneg %p93
      %p100 = scmp.eq.s32.totalorder %s16, 1
      %p101 = por %p99, %p100
      %p102 = scmp.ne.s32.totalorder %s94, %s97
      %p103 = scmp.eq.s32.totalorder %s16, 0
      %p104 = por %p102, %p103
      %p105 = scmp.ne.s32.totalorder %s94, %s97
      %p106 = scmp.eq.s32.totalorder %s21, 1
      %p107 = por %p105, %p106
      %p108 = scmp.ne.s32.totalorder %s97, %s98
      %p109 = scmp.eq.s32.totalorder %s21, 0
      %p110 = por %p108, %p109
      %p111 = scmp.ne.s32.totalorder %s97, %s98
      %p112 = scmp.eq.s32.totalorder %s22, 1
      %p113 = por %p111, %p112
      %p115 = scmp.ne.s32.totalorder %s98, %s114
      %p116 = scmp.eq.s32.totalorder %s22, 0
      %p117 = por %p115, %p116
      %p118 = scmp.le.s32.totalorder 1, %s16
      %p119 = scmp.lt.s32.totalorder %s16, 3
      %p120 = pnand %p118, %p119
      %p121 = pneg %p120
      // Predicated region
      $region9: #{nl_block_forward.1} parent=5 // pred_check
        _
      $region10: #{nl_block_forward.1} parent=5 // pred_check_branch
        %123 = sbr.rel (%p120) target = $region12
      $region11: #{nl_block_forward.1} parent=5 // pred_region
        %s124 = ssub.s32 %s16, 1
        // Predicated region
        $region13: #{nl_block_forward.1} parent=11 // pred_check
          %p125 = pneg %p63
        $region14: #{nl_block_forward.1} parent=11 // pred_check_branch
          %127 = sbr.rel (%p125) target = $region16
        $region15: #{nl_block_forward.1} parent=11 // pred_region
          %s129 = ssub.s32 512, 512
          %130 = vsyncadd [#allocation6], %s129
          %s131 = sshll.u32 [#allocation5], 4
          %s132 = int_to_ptr.vmem [resolvable:$true] %s131
          %137 = dma.hbm_to_vmem [thread:$0]  %s1, 512, %s132, [#allocation6], 128, 128, 8
        $region16: #{nl_block_forward.1} parent=11 // pred_fallthru
          _
        // Predicated region
        $region17: #{nl_block_forward.1} parent=11 // pred_check
          %p138 = pneg %p84
        $region18: #{nl_block_forward.1} parent=11 // pred_check_branch
          %140 = sbr.rel (%p138) target = $region20
        $region19: #{nl_block_forward.1} parent=11 // pred_region
          _
        $region20: #{nl_block_forward.1} parent=11 // pred_fallthru
          _
      $region12: #{nl_block_forward.1} parent=5 // pred_fallthru
        _
      %p141 = scmp.lt.s32.totalorder %s16, 2
      // Predicated region
      $region21: #{nl_block_forward.1} parent=5 // pred_check
        %p142 = pneg %p141
      $region22: #{nl_block_forward.1} parent=5 // pred_check_branch
        %144 = sbr.rel (%p142) target = $region24
      $region23: #{nl_block_forward.1} parent=5 // pred_region
        // Predicated region
        $region25: #{nl_block_forward.1} parent=23 // pred_check
          %p145 = pneg %p36
        $region26: #{nl_block_forward.1} parent=23 // pred_check_branch
          %147 = sbr.rel (%p145) target = $region28
        $region27: #{nl_block_forward.1} parent=23 // pred_region
          %s148 = sand.u32 %s26, 1
          %s149 = scalar_lea.sflag [#allocation3], %s148
          %s150 = sand.u32 %s26, 1
          %s151 = smul.addr %s150, 16
          %s152 = scalar_lea.vmem [#allocation2], %s151
          %s154 = ssub.s32 256, 256
          %155 = vsyncadd %s149, %s154
          %s156 = smul.addr %s16, 2
          %s157 = smul.addr %s156, 128
          %s158 = scalar_lea.hbm %s0, %s157
          %s159 = sshll.u32 %s152, 4
          %s160 = int_to_ptr.vmem [resolvable:$true] %s159
          %165 = dma.hbm_to_vmem [thread:$0]  %s158, 256, %s160, %s149, 128, 128, 8
        $region28: #{nl_block_forward.1} parent=23 // pred_fallthru
          _
      $region24: #{nl_block_forward.1} parent=5 // pred_fallthru
        _
      %p166 = scmp.le.s32.totalorder 1, %s16
      %p167 = scmp.lt.s32.totalorder %s16, 3
      %p168 = pnand %p166, %p167
      %p169 = pneg %p168
      // Predicated region
      $region29: #{nl_block_forward.1} parent=5 // pred_check
        _
      $region30: #{nl_block_forward.1} parent=5 // pred_check_branch
        %171 = sbr.rel (%p168) target = $region32
      $region31: #{nl_block_forward.1} parent=5 // pred_region
        %s172 = ssub.s32 %s16, 1
        %s173 = sand.u32 %s29, 1
        %s174 = scalar_lea.sflag [#allocation3], %s173
        %s175 = sand.u32 %s29, 1
        %s176 = smul.addr %s175, 16
        %s177 = scalar_lea.vmem [#allocation2], %s176
        // Predicated region
        $region33: #{nl_block_forward.1} parent=31 // pred_check
          %p178 = pneg %p42
        $region34: #{nl_block_forward.1} parent=31 // pred_check_branch
          %180 = sbr.rel (%p178) target = $region36
        $region35: #{nl_block_forward.1} parent=31 // pred_region
          %181 = dma.done %s174, 256
        $region36: #{nl_block_forward.1} parent=31 // pred_fallthru
          _
        // Predicated region
        $region37: #{nl_block_forward.1} parent=31 // pred_check
          %p182 = pneg %p63
        $region38: #{nl_block_forward.1} parent=31 // pred_check_branch
          %184 = sbr.rel (%p182) target = $region40
        $region39: #{nl_block_forward.1} parent=31 // pred_region
          %185 = dma.done [#allocation6], 512
        $region40: #{nl_block_forward.1} parent=31 // pred_fallthru
          _
        %s186 = sand.u32 %s29, 1
        %s187 = scalar_lea.sflag [#allocation3], %s186
        %s188 = sand.u32 %s29, 1
        %s189 = smul.addr %s188, 16
        %s190 = scalar_lea.vmem [#allocation2], %s189
        %p191 = pneg %p42
        %p192 = pneg %p39
        %p193 = pneg %p63
        %p194 = pneg %p60
        %p195 = pneg %p84
        %p196 = pneg %p81
        %p197 = pneg %p110
        %p198 = pneg %p107
        %s199 = sand.u32 %s97, 1
        %s200 = scalar_lea.sflag [#allocation4], %s199
        %s201 = sand.u32 %s97, 1
        %s202 = smul.addr %s201, 16
        %s203 = scalar_lea.vmem [#allocation7], %s202
        %v204 = vld [vmem:[%s177] sm:$0xff]
        %v205 = vld [vmem:[%s177 + $0x8] sm:$0xff]
        %v206 = vld [vmem:[#allocation5] sm:$0xff]
        %v207 = vld [vmem:[#allocation5 + $0x8] sm:$0xff]
        %v208 = vld [vmem:[#allocation5 + $0x10] sm:$0xff]
        %v209 = vld [vmem:[#allocation5 + $0x18] sm:$0xff]
        %v210 = vld [vmem:[%s2] sm:$0x1]
        %v212 = vlaneseq
        %v213 = vshrl.u32 %v212, 7
        %v214 = vsub.s32 0, %v213
        %v215 = vrot.slane %v210, %v214
        %vm217 = vcmask 261120
        %v219 = vsel %vm217, %v204, 0
        %v222 = vsel %vm217, %v205, 0
        %224 = vmatprep.subr.mxu0 0.0
        %225 = vmatpush1.msra.mxu0 %v206
        %226 = vmatprep.subr.mxu0 0.0
        %227 = vmatpush1.msra.mxu0 %v207
        %228 = vmatprep.subr.mxu0 0.0
        %229 = vmatpush1.msra.mxu0 %v208
        %230 = vmatprep.subr.mxu0 0.0
        %231 = vmatpush1.msra.mxu0 %v209
        %232 = vmatprep.subr.mxu0 0.0
        %233 = vmatpush1.msra.mxu0 0.0
        %234 = vmatprep.subr.mxu0 0.0
        %235 = vmatpush1.msra.mxu0 0.0
        %236 = vmatprep.subr.mxu0 0.0
        %237 = vmatpush1.msra.mxu0 0.0
        %238 = vmatprep.subr.mxu0 0.0
        %239 = vmatpush1.msra.mxu0 0.0
        %240 = vmatprep.subr.mxu0 0.0
        %241 = vmatpush1.msra.mxu0 0.0
        %242 = vmatprep.subr.mxu0 0.0
        %243 = vmatpush1.msra.mxu0 0.0
        %244 = vmatprep.subr.mxu0 0.0
        %245 = vmatpush1.msra.mxu0 0.0
        %246 = vmatprep.subr.mxu0 0.0
        %247 = vmatpush1.msra.mxu0 0.0
        %248 = vmatprep.subr.mxu0 0.0
        %249 = vmatpush1.msra.mxu0 0.0
        %250 = vmatprep.subr.mxu0 0.0
        %251 = vmatpush1.msra.mxu0 0.0
        %252 = vmatprep.subr.mxu0 0.0
        %253 = vmatpush1.msra.mxu0 0.0
        %254 = vmatprep.subr.mxu0 0.0
        %255 = vmatpush1.msra.mxu0 0.0
        %256 = vmatprep.subr.mxu0 0.0
        %257 = vmatpush1.msra.mxu0 0.0
        %258 = vmatprep.subr.mxu0 0.0
        %259 = vmatpush1.msra.mxu0 0.0
        %260 = vmatprep.subr.mxu0 0.0
        %261 = vmatpush1.msra.mxu0 0.0
        %262 = vmatprep.subr.mxu0 0.0
        %263 = vmatpush1.msra.mxu0 0.0
        %264 = vmatprep.subr.mxu0 0.0
        %265 = vmatpush1.msra.mxu0 0.0
        %266 = vmatprep.subr.mxu0 0.0
        %267 = vmatpush1.msra.mxu0 0.0
        %268 = vmatprep.subr.mxu0 0.0
        %269 = vmatpush1.msra.mxu0 0.0
        %270 = vmatprep.subr.mxu0 0.0
        %271 = vmatpush1.msra.mxu0 0.0
        %272 = vmatprep.subr.mxu0 0.0
        %273 = vmatpush1.msra.mxu0 0.0
        %274 = vmatprep.subr.mxu0 0.0
        %275 = vmatpush1.msra.mxu0 0.0
        %276 = vmatprep.subr.mxu0 0.0
        %277 = vmatpush1.msra.mxu0 0.0
        %278 = vmatprep.subr.mxu0 0.0
        %279 = vmatpush1.msra.mxu0 0.0
        %280 = vmatprep.subr.mxu0 0.0
        %281 = vmatpush1.msra.mxu0 0.0
        %282 = vmatprep.subr.mxu0 0.0
        %283 = vmatpush1.msra.mxu0 0.0
        %284 = vmatprep.subr.mxu0 0.0
        %285 = vmatpush1.msra.mxu0 0.0
        %286 = vmatprep.subr.mxu0 0.0
        %287 = vmatpush1.msra.mxu0 0.0
        %288 = vmatprep.mubr.f32.mxu0 0.0
        %289 = vmatmul.mubr.f32.gmra.mrb[0].mxu0 %v219
        %v290 = vpop.f32.mrb[0].mxu0
        %v291 = vadd.f32 %v215, %v290
        %v292 = vpop.f32.mrb[0].mxu0
        %293 = vmatprep.mubr.f32.mxu0 0.0
        %294 = vmatmul.mubr.f32.gmra.mrb[0].mxu0 %v222
        %v295 = vpop.f32.mrb[0].mxu0
        %v296 = vadd.f32 %v215, %v295
        %v297 = vpop.f32.mrb[0].mxu0
        %298 = vdwg.mxu0
        %301 = vrot.lane.b32.xlu0 %v291, 96
        %v302 = vpop.permute.xlu0 %301
        %303 = vrot.lane.b32.xlu0 %v296, 96
        %v304 = vpop.permute.xlu0 %303
        %v305 = vsel %vm217, %v302, 0
        %v307 = vsel %vm217, %v304, 0
        %v309 = vsel %vm217, %v291, 0
        %v311 = vsel %vm217, %v296, 0
        %313 = vmatprep.subr.mxu0 0.0
        %314 = vmatpush1.xpose.msra.mxu0 %v309
        %315 = vmatprep.subr.mxu0 0.0
        %316 = vmatpush1.xpose.msra.mxu0 %v311
        %317 = vmatprep.subr.mxu0 0.0
        %318 = vmatpush1.xpose.msra.mxu0 0.0
        %319 = vmatprep.subr.mxu0 0.0
        %320 = vmatpush1.xpose.msra.mxu0 0.0
        %321 = vmatprep.subr.mxu0 0.0
        %322 = vmatpush1.xpose.msra.mxu0 0.0
        %323 = vmatprep.subr.mxu0 0.0
        %324 = vmatpush1.xpose.msra.mxu0 0.0
        %325 = vmatprep.subr.mxu0 0.0
        %326 = vmatpush1.xpose.msra.mxu0 0.0
        %327 = vmatprep.subr.mxu0 0.0
        %328 = vmatpush1.xpose.msra.mxu0 0.0
        %329 = vmatprep.subr.mxu0 0.0
        %330 = vmatpush1.xpose.msra.mxu0 0.0
        %331 = vmatprep.subr.mxu0 0.0
        %332 = vmatpush1.xpose.msra.mxu0 0.0
        %333 = vmatprep.subr.mxu0 0.0
        %334 = vmatpush1.xpose.msra.mxu0 0.0
        %335 = vmatprep.subr.mxu0 0.0
        %336 = vmatpush1.xpose.msra.mxu0 0.0
        %337 = vmatprep.subr.mxu0 0.0
        %338 = vmatpush1.xpose.msra.mxu0 0.0
        %339 = vmatprep.subr.mxu0 0.0
        %340 = vmatpush1.xpose.msra.mxu0 0.0
        %341 = vmatprep.subr.mxu0 0.0
        %342 = vmatpush1.xpose.msra.mxu0 0.0
        %343 = vmatprep.subr.mxu0 0.0
        %344 = vmatpush1.xpose.msra.mxu0 0.0
        %345 = vmatprep.subr.mxu0 0.0
        %346 = vmatpush1.xpose.msra.mxu0 0.0
        %347 = vmatprep.subr.mxu0 0.0
        %348 = vmatpush1.xpose.msra.mxu0 0.0
        %349 = vmatprep.subr.mxu0 0.0
        %350 = vmatpush1.xpose.msra.mxu0 0.0
        %351 = vmatprep.subr.mxu0 0.0
        %352 = vmatpush1.xpose.msra.mxu0 0.0
        %353 = vmatprep.subr.mxu0 0.0
        %354 = vmatpush1.xpose.msra.mxu0 0.0
        %355 = vmatprep.subr.mxu0 0.0
        %356 = vmatpush1.xpose.msra.mxu0 0.0
        %357 = vmatprep.subr.mxu0 0.0
        %358 = vmatpush1.xpose.msra.mxu0 0.0
        %359 = vmatprep.subr.mxu0 0.0
        %360 = vmatpush1.xpose.msra.mxu0 0.0
        %361 = vmatprep.subr.mxu0 0.0
        %362 = vmatpush1.xpose.msra.mxu0 0.0
        %363 = vmatprep.subr.mxu0 0.0
        %364 = vmatpush1.xpose.msra.mxu0 0.0
        %365 = vmatprep.subr.mxu0 0.0
        %366 = vmatpush1.xpose.msra.mxu0 0.0
        %367 = vmatprep.subr.mxu0 0.0
        %368 = vmatpush1.xpose.msra.mxu0 0.0
        %369 = vmatprep.subr.mxu0 0.0
        %370 = vmatpush1.xpose.msra.mxu0 0.0
        %371 = vmatprep.subr.mxu0 0.0
        %372 = vmatpush1.xpose.msra.mxu0 0.0
        %373 = vmatprep.subr.mxu0 0.0
        %374 = vmatpush1.xpose.msra.mxu0 0.0
        %375 = vmatprep.subr.mxu0 0.0
        %376 = vmatpush1.xpose.msra.mxu0 0.0
        %377 = vmatprep.mubr.f32.mxu0 0.0
        %378 = vmatmul.mubr.f32.gmra.mrb[0].mxu0 %v305
        %v379 = vpop.f32.mrb[0].mxu0
        %v380 = vadd.f32 0.0, %v379
        %v381 = vpop.f32.mrb[0].mxu0
        %382 = vmatprep.mubr.f32.mxu0 0.0
        %383 = vmatmul.mubr.f32.gmra.mrb[0].mxu0 %v307
        %v384 = vpop.f32.mrb[0].mxu0
        %v385 = vadd.f32 0.0, %v384
        %v386 = vpop.f32.mrb[0].mxu0
        %387 = vdwg.mxu0
        %v388 = vmul.f32 %v380, 0.17677669
        %v389 = vmul.f32 %v385, 0.17677669
        %vm390 = vcmask 130048
        %v391 = vsel %vm390, %v388, -inf
        %392 = vmax.xlane.f32.xlu0 %v391
        %v393 = vpop.xlane.xlu0 %392
        %v394 = vsel %vm390, %v389, -inf
        %395 = vmax.xlane.f32.xlu0 %v394
        %v396 = vpop.xlane.xlu0 %395
        %v397 = vsub.f32 %v388, %v393
        %v398 = vsub.f32 %v389, %v396
        %v399 = vmul.f32 %v397, 1.442695
        %v400 = vpow.pop %v399
        %v401 = vmul.f32 %v398, 1.442695
        %v402 = vpow.pop %v401
        %v403 = vsel %vm390, %v400, 0.0
        %404 = vadd.xlane.f32.xlu0 %v403
        %v405 = vpop.xlane.xlu0 %404
        %v406 = vsel %vm390, %v402, 0.0
        %407 = vadd.xlane.f32.xlu0 %v406
        %v408 = vpop.xlane.xlu0 %407
        %v409 = vrcp.pop %v405
        %v410 = vrcp.pop %v408
        %v411 = vmul.f32 %v400, %v409
        %v412 = vmul.f32 %v402, %v410
        %413 = vrot.lane.b32.xlu0 %v291, 64
        %v414 = vpop.permute.xlu0 %413
        %415 = vrot.lane.b32.xlu0 %v296, 64
        %v416 = vpop.permute.xlu0 %415
        %v420 = vsel %vm390, %v411, 0
        %v423 = vsel %vm390, %v412, 0
        %425 = vmatprep.subr.mxu0 0.0
        %426 = vmatpush1.msra.mxu0 %v414
        %427 = vmatprep.subr.mxu0 0.0
        %428 = vmatpush1.msra.mxu0 %v416
        %429 = vmatprep.subr.mxu0 0.0
        %430 = vmatpush1.msra.mxu0 0.0
        %431 = vmatprep.subr.mxu0 0.0
        %432 = vmatpush1.msra.mxu0 0.0
        %433 = vmatprep.subr.mxu0 0.0
        %434 = vmatpush1.msra.mxu0 0.0
        %435 = vmatprep.subr.mxu0 0.0
        %436 = vmatpush1.msra.mxu0 0.0
        %437 = vmatprep.subr.mxu0 0.0
        %438 = vmatpush1.msra.mxu0 0.0
        %439 = vmatprep.subr.mxu0 0.0
        %440 = vmatpush1.msra.mxu0 0.0
        %441 = vmatprep.subr.mxu0 0.0
        %442 = vmatpush1.msra.mxu0 0.0
        %443 = vmatprep.subr.mxu0 0.0
        %444 = vmatpush1.msra.mxu0 0.0
        %445 = vmatprep.subr.mxu0 0.0
        %446 = vmatpush1.msra.mxu0 0.0
        %447 = vmatprep.subr.mxu0 0.0
        %448 = vmatpush1.msra.mxu0 0.0
        %449 = vmatprep.subr.mxu0 0.0
        %450 = vmatpush1.msra.mxu0 0.0
        %451 = vmatprep.subr.mxu0 0.0
        %452 = vmatpush1.msra.mxu0 0.0
        %453 = vmatprep.subr.mxu0 0.0
        %454 = vmatpush1.msra.mxu0 0.0
        %455 = vmatprep.subr.mxu0 0.0
        %456 = vmatpush1.msra.mxu0 0.0
        %457 = vmatprep.subr.mxu0 0.0
        %458 = vmatpush1.msra.mxu0 0.0
        %459 = vmatprep.subr.mxu0 0.0
        %460 = vmatpush1.msra.mxu0 0.0
        %461 = vmatprep.subr.mxu0 0.0
        %462 = vmatpush1.msra.mxu0 0.0
        %463 = vmatprep.subr.mxu0 0.0
        %464 = vmatpush1.msra.mxu0 0.0
        %465 = vmatprep.subr.mxu0 0.0
        %466 = vmatpush1.msra.mxu0 0.0
        %467 = vmatprep.subr.mxu0 0.0
        %468 = vmatpush1.msra.mxu0 0.0
        %469 = vmatprep.subr.mxu0 0.0
        %470 = vmatpush1.msra.mxu0 0.0
        %471 = vmatprep.subr.mxu0 0.0
        %472 = vmatpush1.msra.mxu0 0.0
        %473 = vmatprep.subr.mxu0 0.0
        %474 = vmatpush1.msra.mxu0 0.0
        %475 = vmatprep.subr.mxu0 0.0
        %476 = vmatpush1.msra.mxu0 0.0
        %477 = vmatprep.subr.mxu0 0.0
        %478 = vmatpush1.msra.mxu0 0.0
        %479 = vmatprep.subr.mxu0 0.0
        %480 = vmatpush1.msra.mxu0 0.0
        %481 = vmatprep.subr.mxu0 0.0
        %482 = vmatpush1.msra.mxu0 0.0
        %483 = vmatprep.subr.mxu0 0.0
        %484 = vmatpush1.msra.mxu0 0.0
        %485 = vmatprep.subr.mxu0 0.0
        %486 = vmatpush1.msra.mxu0 0.0
        %487 = vmatprep.subr.mxu0 0.0
        %488 = vmatpush1.msra.mxu0 0.0
        %489 = vmatprep.mubr.f32.mxu0 0.0
        %490 = vmatmul.mubr.f32.gmra.mrb[0].mxu0 %v420
        %v491 = vpop.f32.mrb[0].mxu0
        %v492 = vadd.f32 0.0, %v491
        %v493 = vpop.f32.mrb[0].mxu0
        %494 = vmatprep.mubr.f32.mxu0 0.0
        %495 = vmatmul.mubr.f32.gmra.mrb[0].mxu0 %v423
        %v496 = vpop.f32.mrb[0].mxu0
        %v497 = vadd.f32 0.0, %v496
        %v498 = vpop.f32.mrb[0].mxu0
        %499 = vdwg.mxu0
        %v500 = vadd.f32 %v204, %v492
        %v501 = vadd.f32 %v205, %v497
        %502 = vst.msk [vmem:[%s203] sm:$0xff] %vm217, %v500
        %503 = vst.msk [vmem:[%s203 + $0x8] sm:$0xff] %vm217, %v501
        %s504 = sand.u32 %s97, 1
        %s505 = scalar_lea.sflag [#allocation4], %s504
        %s506 = sand.u32 %s97, 1
        %s507 = smul.addr %s506, 16
        %s508 = scalar_lea.vmem [#allocation7], %s507
        // Predicated region
        $region41: #{nl_block_forward.1} parent=31 // pred_check
          %p509 = pneg %p107
        $region42: #{nl_block_forward.1} parent=31 // pred_check_branch
          %511 = sbr.rel (%p509) target = $region44
        $region43: #{nl_block_forward.1} parent=31 // pred_region
          %s513 = ssub.s32 256, 256
          %514 = vsyncadd %s505, %s513
          %s515 = smul.addr %s21, 2
          %s516 = smul.addr %s515, 128
          %s517 = scalar_lea.hbm %s3, %s516
          %s518 = sshll.u32 %s508, 4
          %s519 = int_to_ptr.vmem [resolvable:$true] %s518
          %524 = dma.vmem_to_hbm [thread:$0]  %s519, 256, %s517, %s505, 128, 128, 8
        $region44: #{nl_block_forward.1} parent=31 // pred_fallthru
          _
      $region32: #{nl_block_forward.1} parent=5 // pred_fallthru
        _
      %p525 = scmp.le.s32.totalorder 2, %s16
      // Predicated region
      $region45: #{nl_block_forward.1} parent=5 // pred_check
        %p526 = pneg %p525
      $region46: #{nl_block_forward.1} parent=5 // pred_check_branch
        %528 = sbr.rel (%p526) target = $region48
      $region47: #{nl_block_forward.1} parent=5 // pred_region
        %s529 = ssub.s32 %s16, 2
        // Predicated region
        $region49: #{nl_block_forward.1} parent=47 // pred_check
          %p530 = pneg %p113
        $region50: #{nl_block_forward.1} parent=47 // pred_check_branch
          %532 = sbr.rel (%p530) target = $region52
        $region51: #{nl_block_forward.1} parent=47 // pred_region
          %s533 = sand.u32 %s98, 1
          %s534 = scalar_lea.sflag [#allocation4], %s533
          %s535 = sand.u32 %s98, 1
          %s536 = smul.addr %s535, 16
          %s537 = scalar_lea.vmem [#allocation7], %s536
          %538 = dma.done %s534, 256
        $region52: #{nl_block_forward.1} parent=47 // pred_fallthru
          _
      $region48: #{nl_block_forward.1} parent=5 // pred_fallthru
        _
    $region6: #{nl_block_forward.1} parent=1 // loop_footer
      %s20 = sadd.s32 1, %s16
    $region7: #{nl_block_forward.1} parent=1 // loop_footer_branch
      %15 = sbr.rel target = $region3
    $region8: #{nl_block_forward.1} parent=1 // loop_exit
      _
    %539 = vsyncpa [#allocation3], 1
    %s540 = scalar_lea.sflag [#allocation3], 1
    %541 = vsyncpa %s540, 1
    %542 = vsyncpa [#allocation6], 1
    %543 = vsyncpa [#allocation4], 1
    %s544 = scalar_lea.sflag [#allocation4], 1
    %545 = vsyncpa %s544, 1

</llo_original>
